<compile_context>
chip_gen: v6e
topology: v6e:2x2x1
jax: 0.10.0
libtpu: 0.0.40
codegen_flags: <defaults>
</compile_context>

<pallas_src>
import jax
import jax.numpy as jnp
import numpy as np
from jax import lax
from jax.experimental import pallas as pl
from jax.experimental.pallas import tpu as pltpu

K = 4        # ConvTranspose2d kernel_size
STRIDE = 2
PAD = 1


def _make_kernel(cin, w_img, sub, n_sub, t_taps, t_pad):
    """Build the kernel body (all sizes are static Python ints)."""
    # 9 spatial taps (dy, dx) in {-1,0,1}^2, flattened lane offset dy*W + dx.
    offs = [dy * w_img + dx for dy in (-1, 0, 1) for dx in (-1, 0, 1)]

    def kernel(x_ref, w_ref, m_ref, b_ref, o_ref, s_ref):
        # x_ref : f32[Cin, mb]   lane-dense input slab block (mb = n_sub * sub)
        # w_ref : f32[R, Tp]     dense phase-major weight matrix (Tp = pad8(Cin*9))
        # m_ref : f32[T, sub]    border masks, replicated per input channel
        # b_ref : f32[R, 1]      bias column (row = phase*Co + co)
        # o_ref : f32[R, mb]     phase-major output slab block
        # s_ref : f32[Tp, sub]   VMEM scratch holding the shifted-tap matrix
        if t_pad > t_taps:
            # Zero the MXU-alignment padding rows once per grid step so the
            # (zero-weighted) pad rows never contribute NaN/Inf garbage.
            s_ref[t_taps:, :] = jnp.zeros((t_pad - t_taps, sub), jnp.float32)

        wmat = w_ref[...]        # [R, Tp]
        bias = b_ref[...]        # [R, 1]

        def process(i):
            start = i * sub
            if not isinstance(start, int):
                start = pl.multiple_of(start, sub)
            xi = x_ref[:, pl.ds(start, sub)]                    # [Cin, sub]
            # Build the shifted-tap matrix S in VMEM scratch.  Sub-chunks are
            # whole images, so in-chunk wraparound of the roll only lands on
            # lanes that the border mask zeroes out.
            for k, off in enumerate(offs):
                lo, hi = k * cin, (k + 1) * cin
                if off == 0:
                    s_ref[lo:hi, :] = xi
                else:
                    tap = pltpu.roll(xi, shift=(-off) % sub, axis=1)
                    s_ref[lo:hi, :] = tap * m_ref[lo:hi, :]
            # MXU: [R, Tp] x [Tp, sub] -> [R, sub] (tap reduction off the VPU).
            acc = jnp.dot(wmat, s_ref[...], preferred_element_type=jnp.float32)
            o_ref[:, pl.ds(start, sub)] = jnp.tanh(acc + bias).astype(o_ref.dtype)

        if n_sub == 1:
            process(0)
        else:
            def body(i, carry):
                process(i)
                return carry
            lax.fori_loop(0, n_sub, body, 0, unroll=(n_sub <= 4))

    return kernel


def output_forward(x, weight, bias):
    """ConvTranspose2d(k=4, s=2, p=1) + tanh.

    x:      f32[N, Cin, H, W]   (NCHW, as in PyTorch)
    weight: f32[Cin, Co, 4, 4]  (PyTorch ConvTranspose2d weight layout)
    bias:   f32[Co]
    returns f32[N, Co, 2H, 2W]
    """
    n, cin, h, w = x.shape
    co = weight.shape[1]
    ho, wo = STRIDE * h, STRIDE * w
    img = h * w                      # lanes per image
    m = n * img                      # flattened lane axis (n, qy, qx)
    t_taps = cin * 9                 # 9 spatial shifts per input channel
    t_pad = ((t_taps + 7) // 8) * 8  # sublane-aligned contraction dim for the MXU
    r_rows = 4 * co                  # 4 output phases * Co

    # ---- lane-dense input slab: [Cin, N*H*W], lane = n*H*W + qy*W + qx ----------
    x_flat = jnp.transpose(x.astype(jnp.float32), (1, 0, 2, 3)).reshape(cin, m)

    # ---- dense phase-major weight matrix [4*Co, Cin*9] (structural zeros baked in)
    # wmat[(py*2+px)*Co + co, ((sy*3+sx)*Cin) + ci] = W[ci, co, 3+py-2*sy, 3+px-2*sx]
    # when (sy-py, sx-px) in {0,1}^2, else 0.
    wf = weight.astype(jnp.float32)
    wblk = jnp.zeros((2, 2, co, 3, 3, cin), jnp.float32)
    for sy in range(3):
        for sx in range(3):
            for py in range(2):
                for px in range(2):
                    if 0 <= sy - py <= 1 and 0 <= sx - px <= 1:
                        ky, kx = 3 + py - 2 * sy, 3 + px - 2 * sx
                        wblk = wblk.at[py, px, :, sy, sx, :].set(wf[:, :, ky, kx].T)
    wmat = wblk.reshape(r_rows, t_taps)
    wmat = jnp.pad(wmat, ((0, 0), (0, t_pad - t_taps)))          # [R, Tp]

    b_col = jnp.tile(bias.astype(jnp.float32), 4).reshape(r_rows, 1)

    # ---- lane blocking: image-aligned, 128-lane dense, targeted at ~16K lanes ----
    target_lanes = 16384
    divs = [p for p in range(1, n + 1) if n % p == 0]
    aligned = [p for p in divs if (p * img) % 128 == 0]
    if aligned:
        pool = [p for p in aligned if p < n] or aligned    # keep >=2 grid steps if possible
        fits = [p for p in pool if p * img <= target_lanes]
        p_blk = max(fits) if fits else min(pool)
        mb = p_blk * img
    else:
        p_blk, mb = n, m                                   # full-extent block (always legal)
    # in-kernel sub-chunk: smallest image-aligned, 128-lane-dense chunk of the block
    sub_imgs = next((s for s in range(1, p_blk + 1)
                     if p_blk % s == 0 and (s * img) % 128 == 0), p_blk)
    sub = sub_imgs * img
    n_sub = mb // sub
    grid = (m // mb,)

    # ---- border masks (period = one image), replicated per channel & sub-chunk ---
    qy = np.arange(img) // w
    qx = np.arange(img) % w
    mrows = np.empty((9, img), np.float32)
    k = 0
    for dy in (-1, 0, 1):
        for dx in (-1, 0, 1):
            mrows[k] = ((qy + dy >= 0) & (qy + dy < h) &
                        (qx + dx >= 0) & (qx + dx < w)).astype(np.float32)
            k += 1
    masks = jnp.asarray(np.tile(np.repeat(mrows, cin, axis=0), (1, sub // img)))

    # ---- VMEM budget: double-buffered I/O blocks + scratch + constants -----------
    vmem_est = 4 * (2 * (cin + r_rows) * mb        # pipelined input/output blocks
                    + 2 * t_taps * sub             # mask block
                    + t_pad * sub                  # tap-matrix scratch
                    + r_rows * t_pad + r_rows)     # weights + bias
    vmem_limit = int(min(max(2 * vmem_est, 32 * 2 ** 20), 48 * 2 ** 20))

    kernel = _make_kernel(cin, w, sub, n_sub, t_taps, t_pad)
    o_flat = pl.pallas_call(
        kernel,
        out_shape=jax.ShapeDtypeStruct((r_rows, m), x.dtype),
        grid=grid,
        in_specs=[
            pl.BlockSpec((cin, mb), lambda i: (0, i)),          # input slab block
            pl.BlockSpec((r_rows, t_pad), lambda i: (0, 0)),    # dense weight matrix
            pl.BlockSpec((t_taps, sub), lambda i: (0, 0)),      # border masks
            pl.BlockSpec((r_rows, 1), lambda i: (0, 0)),        # bias column
        ],
        out_specs=pl.BlockSpec((r_rows, mb), lambda i: (0, i)),
        scratch_shapes=[pltpu.VMEM((t_pad, sub), jnp.float32)],
        compiler_params=pltpu.CompilerParams(
            dimension_semantics=("parallel",),
            vmem_limit_bytes=vmem_limit),
    )(x_flat, wmat, masks, b_col)

    # Phase de-interleave back to NCHW: o_flat[(py*2+px)*Co+co, n*H*W+qy*W+qx].
    # Pure layout plumbing; XLA can fuse it with the downstream consumer.
    out = o_flat.reshape(2, 2, co, n, h, w)            # [py, px, co, n, qy, qx]
    out = jnp.transpose(out, (3, 2, 4, 0, 5, 1))       # [n, co, qy, py, qx, px]
    return out.reshape(n, co, ho, wo)


def _reference(x, weight, bias):
    # Pure-JAX reference: conv_general_dilated with lhs_dilation == transposed conv.
    wf = jnp.transpose(weight[:, :, ::-1, ::-1], (1, 0, 2, 3))  # [Co, Cin, 4, 4], OIHW
    y = jax.lax.conv_general_dilated(
        x, wf, window_strides=(1, 1),
        padding=((K - 1 - PAD, K - 1 - PAD),) * 2,
        lhs_dilation=(STRIDE, STRIDE),
        dimension_numbers=("NCHW", "OIHW", "NCHW"))
    return jnp.tanh(y + bias[None, :, None, None])


if __name__ == "__main__":
    key = jax.random.PRNGKey(0)
    k_x, k_w, k_b = jax.random.split(key, 3)

    N, CIN, CO, H, W = 2, 4, 3, 16, 16          # x_in=4, nc=3, 16x16 -> 32x32
    x = jax.random.normal(k_x, (N, CIN, H, W), jnp.float32)
    bound = 1.0 / np.sqrt(CIN * K * K)
    weight = jax.random.uniform(k_w, (CIN, CO, K, K), jnp.float32, -bound, bound)
    bias = jax.random.uniform(k_b, (CO,), jnp.float32, -bound, bound)

    out = jax.jit(output_forward)(x, weight, bias)
    out = jax.block_until_ready(out)

    ref = _reference(x, weight, bias)
    # Tolerance covers MXU multi-pass f32 rounding vs the VPU/XLA reference;
    # any tap/phase/mask logic error would show up as O(0.1-1) discrepancies.
    np.testing.assert_allclose(np.asarray(out), np.asarray(ref), atol=1e-3, rtol=1e-3)
    assert out.shape == (N, CO, STRIDE * H, STRIDE * W)
    print("KERNEL_OK")
</pallas_src>

<mosaic_0001>
module attributes {stable_mosaic.version = 11 : i64} {
  func.func @kernel(%arg0: i32, %arg1: memref<4x256xf32, #tpu.memory_space<vmem>>, %arg2: memref<12x40xf32, #tpu.memory_space<vmem>>, %arg3: memref<36x256xf32, #tpu.memory_space<vmem>>, %arg4: memref<12x1xf32, #tpu.memory_space<vmem>>, %arg5: memref<12x256xf32, #tpu.memory_space<vmem>>, %arg6: memref<40x256xf32, #tpu.memory_space<vmem>>) attributes {dimension_semantics = [#tpu.dimension_semantics<parallel>], iteration_bounds = array<i64: 2>, scalar_prefetch = 0 : i64, scratch_operands = 1 : i64, tpu.core_type = #tpu.core_type<tc>, window_params = [{transform_indices = @transform_0, window_bounds = array<i64: 4, 256>}, {pipeline_mode = #tpu.pipeline_mode<synchronous>, transform_indices = @transform_1, window_bounds = array<i64: 12, 40>}, {pipeline_mode = #tpu.pipeline_mode<synchronous>, transform_indices = @transform_2, window_bounds = array<i64: 36, 256>}, {pipeline_mode = #tpu.pipeline_mode<synchronous>, transform_indices = @transform_3, window_bounds = array<i64: 12, 1>}, {transform_indices = @transform_4, window_bounds = array<i64: 12, 256>}]} {
    %cst = arith.constant 0.000000e+00 : f32
    %0 = vector.broadcast %cst : f32 to vector<4x256xf32>
    %c36 = arith.constant 36 : index
    %c0 = arith.constant 0 : index
    %1 = vector.load %arg6[%c36, %c0] : memref<40x256xf32, #tpu.memory_space<vmem>>, vector<4x256xf32>
    tpu.vector_store %arg6[%c36, %c0], %0 {strides = array<i32>} : memref<40x256xf32, #tpu.memory_space<vmem>>, vector<4x256xf32>,
    %c0_0 = arith.constant 0 : index
    %c0_1 = arith.constant 0 : index
    %2 = vector.load %arg2[%c0_0, %c0_1] : memref<12x40xf32, #tpu.memory_space<vmem>>, vector<12x40xf32>
    %c0_2 = arith.constant 0 : index
    %c0_3 = arith.constant 0 : index
    %3 = vector.load %arg4[%c0_2, %c0_3] : memref<12x1xf32, #tpu.memory_space<vmem>>, vector<12x1xf32>
    %c0_4 = arith.constant 0 : index
    %c0_5 = arith.constant 0 : index
    %4 = vector.load %arg1[%c0_4, %c0_5] : memref<4x256xf32, #tpu.memory_space<vmem>>, vector<4x256xf32>
    %c17_i32 = arith.constant 17 : i32
    %5 = tpu.dynamic_rotate %4 by %c17_i32 dim 1 : vector<4x256xf32>, i32 -> vector<4x256xf32>
    %c0_6 = arith.constant 0 : index
    %c0_7 = arith.constant 0 : index
    %6 = vector.load %arg3[%c0_6, %c0_7] : memref<36x256xf32, #tpu.memory_space<vmem>>, vector<4x256xf32>
    %7 = arith.mulf %5, %6 : vector<4x256xf32>
    %c0_8 = arith.constant 0 : index
    %c0_9 = arith.constant 0 : index
    %8 = vector.load %arg6[%c0_8, %c0_9] : memref<40x256xf32, #tpu.memory_space<vmem>>, vector<4x256xf32>
    tpu.vector_store %arg6[%c0_8, %c0_9], %7 {strides = array<i32>} : memref<40x256xf32, #tpu.memory_space<vmem>>, vector<4x256xf32>,
    %c16_i32 = arith.constant 16 : i32
    %9 = tpu.dynamic_rotate %4 by %c16_i32 dim 1 : vector<4x256xf32>, i32 -> vector<4x256xf32>
    %c4 = arith.constant 4 : index
    %c0_10 = arith.constant 0 : index
    %10 = vector.load %arg3[%c4, %c0_10] : memref<36x256xf32, #tpu.memory_space<vmem>>, vector<4x256xf32>
    %11 = arith.mulf %9, %10 : vector<4x256xf32>
    %c4_11 = arith.constant 4 : index
    %c0_12 = arith.constant 0 : index
    %12 = vector.load %arg6[%c4_11, %c0_12] : memref<40x256xf32, #tpu.memory_space<vmem>>, vector<4x256xf32>
    tpu.vector_store %arg6[%c4_11, %c0_12], %11 {strides = array<i32>} : memref<40x256xf32, #tpu.memory_space<vmem>>, vector<4x256xf32>,
    %c15_i32 = arith.constant 15 : i32
    %13 = tpu.dynamic_rotate %4 by %c15_i32 dim 1 : vector<4x256xf32>, i32 -> vector<4x256xf32>
    %c8 = arith.constant 8 : index
    %c0_13 = arith.constant 0 : index
    %14 = vector.load %arg3[%c8, %c0_13] : memref<36x256xf32, #tpu.memory_space<vmem>>, vector<4x256xf32>
    %15 = arith.mulf %13, %14 : vector<4x256xf32>
    %c8_14 = arith.constant 8 : index
    %c0_15 = arith.constant 0 : index
    %16 = vector.load %arg6[%c8_14, %c0_15] : memref<40x256xf32, #tpu.memory_space<vmem>>, vector<4x256xf32>
    tpu.vector_store %arg6[%c8_14, %c0_15], %15 {strides = array<i32>} : memref<40x256xf32, #tpu.memory_space<vmem>>, vector<4x256xf32>,
    %c1_i32 = arith.constant 1 : i32
    %17 = tpu.dynamic_rotate %4 by %c1_i32 dim 1 : vector<4x256xf32>, i32 -> vector<4x256xf32>
    %c12 = arith.constant 12 : index
    %c0_16 = arith.constant 0 : index
    %18 = vector.load %arg3[%c12, %c0_16] : memref<36x256xf32, #tpu.memory_space<vmem>>, vector<4x256xf32>
    %19 = arith.mulf %17, %18 : vector<4x256xf32>
    %c12_17 = arith.constant 12 : index
    %c0_18 = arith.constant 0 : index
    %20 = vector.load %arg6[%c12_17, %c0_18] : memref<40x256xf32, #tpu.memory_space<vmem>>, vector<4x256xf32>
    tpu.vector_store %arg6[%c12_17, %c0_18], %19 {strides = array<i32>} : memref<40x256xf32, #tpu.memory_space<vmem>>, vector<4x256xf32>,
    %c16 = arith.constant 16 : index
    %c0_19 = arith.constant 0 : index
    %21 = vector.load %arg6[%c16, %c0_19] : memref<40x256xf32, #tpu.memory_space<vmem>>, vector<4x256xf32>
    tpu.vector_store %arg6[%c16, %c0_19], %4 {strides = array<i32>} : memref<40x256xf32, #tpu.memory_space<vmem>>, vector<4x256xf32>,
    %c255_i32 = arith.constant 255 : i32
    %22 = tpu.dynamic_rotate %4 by %c255_i32 dim 1 : vector<4x256xf32>, i32 -> vector<4x256xf32>
    %c20 = arith.constant 20 : index
    %c0_20 = arith.constant 0 : index
    %23 = vector.load %arg3[%c20, %c0_20] : memref<36x256xf32, #tpu.memory_space<vmem>>, vector<4x256xf32>
    %24 = arith.mulf %22, %23 : vector<4x256xf32>
    %c20_21 = arith.constant 20 : index
    %c0_22 = arith.constant 0 : index
    %25 = vector.load %arg6[%c20_21, %c0_22] : memref<40x256xf32, #tpu.memory_space<vmem>>, vector<4x256xf32>
    tpu.vector_store %arg6[%c20_21, %c0_22], %24 {strides = array<i32>} : memref<40x256xf32, #tpu.memory_space<vmem>>, vector<4x256xf32>,
    %c241_i32 = arith.constant 241 : i32
    %26 = tpu.dynamic_rotate %4 by %c241_i32 dim 1 : vector<4x256xf32>, i32 -> vector<4x256xf32>
    %c24 = arith.constant 24 : index
    %c0_23 = arith.constant 0 : index
    %27 = vector.load %arg3[%c24, %c0_23] : memref<36x256xf32, #tpu.memory_space<vmem>>, vector<4x256xf32>
    %28 = arith.mulf %26, %27 : vector<4x256xf32>
    %c24_24 = arith.constant 24 : index
    %c0_25 = arith.constant 0 : index
    %29 = vector.load %arg6[%c24_24, %c0_25] : memref<40x256xf32, #tpu.memory_space<vmem>>, vector<4x256xf32>
    tpu.vector_store %arg6[%c24_24, %c0_25], %28 {strides = array<i32>} : memref<40x256xf32, #tpu.memory_space<vmem>>, vector<4x256xf32>,
    %c240_i32 = arith.constant 240 : i32
    %30 = tpu.dynamic_rotate %4 by %c240_i32 dim 1 : vector<4x256xf32>, i32 -> vector<4x256xf32>
    %c28 = arith.constant 28 : index
    %c0_26 = arith.constant 0 : index
    %31 = vector.load %arg3[%c28, %c0_26] : memref<36x256xf32, #tpu.memory_space<vmem>>, vector<4x256xf32>
    %32 = arith.mulf %30, %31 : vector<4x256xf32>
    %c28_27 = arith.constant 28 : index
    %c0_28 = arith.constant 0 : index
    %33 = vector.load %arg6[%c28_27, %c0_28] : memref<40x256xf32, #tpu.memory_space<vmem>>, vector<4x256xf32>
    tpu.vector_store %arg6[%c28_27, %c0_28], %32 {strides = array<i32>} : memref<40x256xf32, #tpu.memory_space<vmem>>, vector<4x256xf32>,
    %c239_i32 = arith.constant 239 : i32
    %34 = tpu.dynamic_rotate %4 by %c239_i32 dim 1 : vector<4x256xf32>, i32 -> vector<4x256xf32>
    %c32 = arith.constant 32 : index
    %c0_29 = arith.constant 0 : index
    %35 = vector.load %arg3[%c32, %c0_29] : memref<36x256xf32, #tpu.memory_space<vmem>>, vector<4x256xf32>
    %36 = arith.mulf %34, %35 : vector<4x256xf32>
    %c32_30 = arith.constant 32 : index
    %c0_31 = arith.constant 0 : index
    %37 = vector.load %arg6[%c32_30, %c0_31] : memref<40x256xf32, #tpu.memory_space<vmem>>, vector<4x256xf32>
    tpu.vector_store %arg6[%c32_30, %c0_31], %36 {strides = array<i32>} : memref<40x256xf32, #tpu.memory_space<vmem>>, vector<4x256xf32>,
    %c0_32 = arith.constant 0 : index
    %c0_33 = arith.constant 0 : index
    %38 = vector.load %arg6[%c0_32, %c0_33] : memref<40x256xf32, #tpu.memory_space<vmem>>, vector<40x256xf32>
    %cst_34 = arith.constant dense<0.000000e+00> : vector<12x256xf32>
    %39 = tpu.matmul %2, %38, %cst_34 {dimension_numbers = #tpu.dot_dimension_numbers<[1], [0], [0], [1], [0, 0, 1, 1], [], []>} : vector<12x40xf32>, vector<40x256xf32>, vector<12x256xf32> -> vector<12x256xf32>
    %40 = vector.broadcast %3 : vector<12x1xf32> to vector<12x256xf32>
    %41 = arith.addf %39, %40 : vector<12x256xf32>
    %42 = math.tanh %41 : vector<12x256xf32>
    %c0_35 = arith.constant 0 : index
    %c0_36 = arith.constant 0 : index
    %43 = vector.load %arg5[%c0_35, %c0_36] : memref<12x256xf32, #tpu.memory_space<vmem>>, vector<12x256xf32>
    tpu.vector_store %arg5[%c0_35, %c0_36], %42 {strides = array<i32>} : memref<12x256xf32, #tpu.memory_space<vmem>>, vector<12x256xf32>,
    return
  }
  func.func @transform_0(%arg0: i32) -> (i32, i32) {
    %c0_i32 = arith.constant 0 : i32
    %c0_i32_0 = arith.constant 0 : i32
    return %c0_i32, %arg0 : i32, i32
  }
  func.func @transform_1(%arg0: i32) -> (i32, i32) {
    %c0_i32 = arith.constant 0 : i32
    %c0_i32_0 = arith.constant 0 : i32
    %c0_i32_1 = arith.constant 0 : i32
    return %c0_i32, %c0_i32_0 : i32, i32
  }
  func.func @transform_2(%arg0: i32) -> (i32, i32) {
    %c0_i32 = arith.constant 0 : i32
    %c0_i32_0 = arith.constant 0 : i32
    %c0_i32_1 = arith.constant 0 : i32
    return %c0_i32, %c0_i32_0 : i32, i32
  }
  func.func @transform_3(%arg0: i32) -> (i32, i32) {
    %c0_i32 = arith.constant 0 : i32
    %c0_i32_0 = arith.constant 0 : i32
    %c0_i32_1 = arith.constant 0 : i32
    return %c0_i32, %c0_i32_0 : i32, i32
  }
  func.func @transform_4(%arg0: i32) -> (i32, i32) {
    %c0_i32 = arith.constant 0 : i32
    %c0_i32_0 = arith.constant 0 : i32
    return %c0_i32, %arg0 : i32, i32
  }
}

</mosaic_0001>

<llo_original>
// kernel: tile.0
$region0: #{tile.0}
  %s0 = inlined_call_operand.vmem [shape: f32[4,3], index: 0, kind: input, shape index: {}]
  %s1 = inlined_call_operand.vmem [shape: f32[12,1], index: 1, kind: output, shape index: {}]
  $region1: #{tile.0} parent=0
    #allocation0 [shape = 'u8[4096]{0}', space=vmem, size = 0x1000, scoped, tag = 'scoped mem for input reshape']
    %s3 = sshll.u32 1, 4
    %s4 = ssub.s32 %s3, 1
    %v5 = vld [vmem:[%s0] sm:%s4]
    %6 = vst [vmem:[#allocation0] sm:%s4] %v5
    %v7 = vld [vmem:[#allocation0] sm:$0xf]
    %vm8 = vcmask 7168
    %9 = vst.msk [vmem:[%s1] ss:$3 sm:$0xf] %vm8, %v7
    %v10 = vld [vmem:[#allocation0] sm:$0xf]
    %11 = vrot.lane.b32.xlu0 %v10, 127
    %v12 = vpop.permute.xlu0 %11
    %vm13 = vcmask 7168
    %s14 = scalar_lea.vmem %s1, 1
    %15 = vst.msk [vmem:[%s14] ss:$3 sm:$0xf] %vm13, %v12
    %v16 = vld [vmem:[#allocation0] sm:$0xf]
    %17 = vrot.lane.b32.xlu0 %v16, 126
    %v18 = vpop.permute.xlu0 %17
    %vm19 = vcmask 7168
    %s20 = scalar_lea.vmem %s1, 2
    %21 = vst.msk [vmem:[%s20] ss:$3 sm:$0xf] %vm19, %v18

// kernel: tile.8
$region0: #{tile.8}
  #allocation2 [shape = 's32[1]{0}', space=sflag, size = 0x4, scoped, tag = 'scoped memory for tile.8']
  %s0 = inlined_call_operand.hbm [shape: f32[3], index: 0, kind: input, shape index: {}]
  %s1 = inlined_call_operand.vmem [shape: f32[4,3], index: 1, kind: output, shape index: {}]
  $region1: #{tile.8} parent=0
    #allocation0 [shape = 'u8[512]{0}', space=vmem, size = 0x400, scoped, tag = 'operand span for operand 0']
    #allocation1 [shape = 's32[1]{0}', space=sflag, size = 0x4, scoped, tag = 'scoped memory for tile.8']
    %2 = vsyncpa [#allocation1], 0
    // Predicated region
    $region2: #{tile.8} parent=1 // pred_check
      _
    $region3: #{tile.8} parent=1 // pred_check_branch
      %4 = sbr.rel (0) target = $region5
    $region4: #{tile.8} parent=1 // pred_region
      %s6 = ssub.s32 16, 16
      %7 = vsyncadd [#allocation1], %s6
      %s9 = sshll.u32 [#allocation0], 4
      %s10 = int_to_ptr.vmem [resolvable:$true] %s9
      %12 = dma.hbm_to_vmem [thread:$0]  %s0, 16, %s10, [#allocation1]
    $region5: #{tile.8} parent=1 // pred_fallthru
      _
    // Predicated region
    $region6: #{tile.8} parent=1 // pred_check
      _
    $region7: #{tile.8} parent=1 // pred_check_branch
      %14 = sbr.rel (0) target = $region9
    $region8: #{tile.8} parent=1 // pred_region
      %15 = dma.done [#allocation1], 16
    $region9: #{tile.8} parent=1 // pred_fallthru
      _
    %v16 = vld [vmem:[#allocation0] ss:$0 sm:$0xff]
    %17 = vst [vmem:[%s1] sm:$0xf] %v16
    %18 = vsyncpa [#allocation1], 1

// kernel: output_forward.1
$region0: #{output_forward.1}
  #allocation0 [shape = 'u32[]', space=smem, size = 0x4, offset = 0x4, fixed_abs, tag = 'smem constant byte address 0x4 - core index']
  #allocation1 [shape = 'u32[144,128]{1,0:T(1,128)}', space=vmem, size = 0x12000, scoped, tag = 'internal scratch']
  #allocation2 [shape = 'f32[40,256]{1,0:T(8,128)}', space=vmem, size = 0xa000, scoped, tag = 'scratch operand']
  %s0 = inlined_call_operand.vmem [shape: f32[4,512], index: 0, kind: input, shape index: {}]
  %s1 = inlined_call_operand.vmem [shape: f32[12,40], index: 1, kind: input, shape index: {}]
  %s2 = inlined_call_operand.hbm [shape: f32[36,256], index: 2, kind: input, shape index: {}]
  %s3 = inlined_call_operand.vmem [shape: f32[12,1], index: 3, kind: input, shape index: {}]
  %s4 = inlined_call_operand.vmem [shape: f32[12,512], index: 4, kind: output, shape index: {}]
  %s5 = sld [smem:[#allocation0]]
  $region72: #{output_forward.1} parent=0
    _
  %s7 = ssub.s32 1, %s5
  %s8 = scalar_select 0, %s7, %s5
  $region1: #{output_forward.1} parent=0
    #allocation3 [shape = 'u8[40960]{0}', space=vmem, size = 0xa000, scoped, tag = 'input window, operand 2, single buffered']
    #allocation4 [shape = 's32[2]{0}', space=sflag, size = 0x8, scoped, tag = 'scoped memory for output_forward.1']
    #allocation5 [shape = 'u8[32768]{0}', space=vmem, size = 0x8000, scoped, tag = 'output window, operand 0']
    %9 = vsyncpa [#allocation4], 0
    loop: start=0, step=1, limit=4
    $region2: #{output_forward.1} parent=1 // loop_pre_header
      _
    $region3: #{output_forward.1} parent=1 // loop_header
      %s11 = sphi 0, %s15
      %p12 = scmp.ge.s32.totalorder %s11, 4
      %s21 = sphi 0, %s23
      %s24 = sphi 0, %s21
      %s25 = sphi 0, %s24
      %s41 = sphi 0, %s25
      %s45 = sphi 0, %s45
      %s47 = sphi 0, %s45
      %s48 = sphi 0, %s47
      %s62 = sphi 0, %s48
      %s66 = sphi 0, %s66
      %s68 = sphi 0, %s66
      %s69 = sphi 0, %s68
      %s83 = sphi 0, %s69
      %s87 = sphi 0, %s87
      %s89 = sphi 0, %s87
      %s90 = sphi 0, %s89
      %s104 = sphi 0, %s90
      %s110 = sphi 0, %s112
      %s113 = sphi 0, %s110
      %s114 = sphi 0, %s113
      %s130 = sphi 0, %s114
    $region4: #{output_forward.1} parent=1 // loop_header_branch
      %14 = sbr.rel (%p12) target = $region8
    $region5: #{output_forward.1} parent=1 // loop_body
      %s16 = ssub.s32 %s11, 1
      %s17 = ssub.s32 %s11, 2
      %s18 = sadd.s32 %s11, 1
      %s19 = ssub.s32 %s11, %s18
      %p20 = scmp.eq.s32.totalorder %s19, 0
      %s22 = sadd.s32 %s21, 1
      %s23 = scalar_select %p20, %s21, %s22
      %p26 = pneg %p20
      %p27 = scmp.eq.s32.totalorder %s11, 1
      %p28 = por %p26, %p27
      %p29 = scmp.ne.s32.totalorder %s21, %s24
      %p30 = scmp.eq.s32.totalorder %s11, 0
      %p31 = por %p29, %p30
      %p32 = scmp.ne.s32.totalorder %s21, %s24
      %p33 = scmp.eq.s32.totalorder %s16, 1
      %p34 = por %p32, %p33
      %p35 = scmp.ne.s32.totalorder %s24, %s25
      %p36 = scmp.eq.s32.totalorder %s16, 0
      %p37 = por %p35, %p36
      %p38 = scmp.ne.s32.totalorder %s24, %s25
      %p39 = scmp.eq.s32.totalorder %s17, 1
      %p40 = por %p38, %p39
      %p42 = scmp.ne.s32.totalorder %s25, %s41
      %p43 = scmp.eq.s32.totalorder %s17, 0
      %p44 = por %p42, %p43
      %s46 = sadd.s32 %s45, 1
      %p49 = scmp.eq.s32.totalorder %s11, 1
      %p50 = scmp.ne.s32.totalorder %s45, %s47
      %p51 = scmp.eq.s32.totalorder %s11, 0
      %p52 = por %p50, %p51
      %p53 = scmp.ne.s32.totalorder %s45, %s47
      %p54 = scmp.eq.s32.totalorder %s16, 1
      %p55 = por %p53, %p54
      %p56 = scmp.ne.s32.totalorder %s47, %s48
      %p57 = scmp.eq.s32.totalorder %s16, 0
      %p58 = por %p56, %p57
      %p59 = scmp.ne.s32.totalorder %s47, %s48
      %p60 = scmp.eq.s32.totalorder %s17, 1
      %p61 = por %p59, %p60
      %p63 = scmp.ne.s32.totalorder %s48, %s62
      %p64 = scmp.eq.s32.totalorder %s17, 0
      %p65 = por %p63, %p64
      %s67 = sadd.s32 %s66, 1
      %p70 = scmp.eq.s32.totalorder %s11, 1
      %p71 = scmp.ne.s32.totalorder %s66, %s68
      %p72 = scmp.eq.s32.totalorder %s11, 0
      %p73 = por %p71, %p72
      %p74 = scmp.ne.s32.totalorder %s66, %s68
      %p75 = scmp.eq.s32.totalorder %s16, 1
      %p76 = por %p74, %p75
      %p77 = scmp.ne.s32.totalorder %s68, %s69
      %p78 = scmp.eq.s32.totalorder %s16, 0
      %p79 = por %p77, %p78
      %p80 = scmp.ne.s32.totalorder %s68, %s69
      %p81 = scmp.eq.s32.totalorder %s17, 1
      %p82 = por %p80, %p81
      %p84 = scmp.ne.s32.totalorder %s69, %s83
      %p85 = scmp.eq.s32.totalorder %s17, 0
      %p86 = por %p84, %p85
      %s88 = sadd.s32 %s87, 1
      %p91 = scmp.eq.s32.totalorder %s11, 1
      %p92 = scmp.ne.s32.totalorder %s87, %s89
      %p93 = scmp.eq.s32.totalorder %s11, 0
      %p94 = por %p92, %p93
      %p95 = scmp.ne.s32.totalorder %s87, %s89
      %p96 = scmp.eq.s32.totalorder %s16, 1
      %p97 = por %p95, %p96
      %p98 = scmp.ne.s32.totalorder %s89, %s90
      %p99 = scmp.eq.s32.totalorder %s16, 0
      %p100 = por %p98, %p99
      %p101 = scmp.ne.s32.totalorder %s89, %s90
      %p102 = scmp.eq.s32.totalorder %s17, 1
      %p103 = por %p101, %p102
      %p105 = scmp.ne.s32.totalorder %s90, %s104
      %p106 = scmp.eq.s32.totalorder %s17, 0
      %p107 = por %p105, %p106
      %s108 = ssub.s32 %s11, %s18
      %p109 = scmp.eq.s32.totalorder %s108, 0
      %s111 = sadd.s32 %s110, 1
      %s112 = scalar_select %p109, %s110, %s111
      %p115 = pneg %p109
      %p116 = scmp.eq.s32.totalorder %s11, 1
      %p117 = por %p115, %p116
      %p118 = scmp.ne.s32.totalorder %s110, %s113
      %p119 = scmp.eq.s32.totalorder %s11, 0
      %p120 = por %p118, %p119
      %p121 = scmp.ne.s32.totalorder %s110, %s113
      %p122 = scmp.eq.s32.totalorder %s16, 1
      %p123 = por %p121, %p122
      %p124 = scmp.ne.s32.totalorder %s113, %s114
      %p125 = scmp.eq.s32.totalorder %s16, 0
      %p126 = por %p124, %p125
      %p127 = scmp.ne.s32.totalorder %s113, %s114
      %p128 = scmp.eq.s32.totalorder %s17, 1
      %p129 = por %p127, %p128
      %p131 = scmp.ne.s32.totalorder %s114, %s130
      %p132 = scmp.eq.s32.totalorder %s17, 0
      %p133 = por %p131, %p132
      %p134 = scmp.le.s32.totalorder 1, %s11
      %p135 = scmp.lt.s32.totalorder %s11, 3
      %p136 = pnand %p134, %p135
      %p137 = pneg %p136
      // Predicated region
      $region9: #{output_forward.1} parent=5 // pred_check
        _
      $region10: #{output_forward.1} parent=5 // pred_check_branch
        %139 = sbr.rel (%p136) target = $region12
      $region11: #{output_forward.1} parent=5 // pred_region
        %s140 = ssub.s32 %s11, 1
        // Predicated region
        $region13: #{output_forward.1} parent=11 // pred_check
          %p141 = pneg %p58
        $region14: #{output_forward.1} parent=11 // pred_check_branch
          %143 = sbr.rel (%p141) target = $region16
        $region15: #{output_forward.1} parent=11 // pred_region
          _
        $region16: #{output_forward.1} parent=11 // pred_fallthru
          _
        // Predicated region
        $region17: #{output_forward.1} parent=11 // pred_check
          %p144 = pneg %p79
        $region18: #{output_forward.1} parent=11 // pred_check_branch
          %146 = sbr.rel (%p144) target = $region20
        $region19: #{output_forward.1} parent=11 // pred_region
          %s148 = ssub.s32 1280, 1280
          %149 = vsyncadd [#allocation4], %s148
          %s150 = sshll.u32 [#allocation3], 4
          %s151 = int_to_ptr.vmem [resolvable:$true] %s150
          %156 = dma.hbm_to_vmem [thread:$0]  %s2, 1280, %s151, [#allocation4], 256, 256, 16
        $region20: #{output_forward.1} parent=11 // pred_fallthru
          _
        // Predicated region
        $region21: #{output_forward.1} parent=11 // pred_check
          %p157 = pneg %p100
        $region22: #{output_forward.1} parent=11 // pred_check_branch
          %159 = sbr.rel (%p157) target = $region24
        $region23: #{output_forward.1} parent=11 // pred_region
          _
        $region24: #{output_forward.1} parent=11 // pred_fallthru
          _
      $region12: #{output_forward.1} parent=5 // pred_fallthru
        _
      %p160 = scmp.lt.s32.totalorder %s11, 2
      // Predicated region
      $region25: #{output_forward.1} parent=5 // pred_check
        %p161 = pneg %p160
      $region26: #{output_forward.1} parent=5 // pred_check_branch
        %163 = sbr.rel (%p161) target = $region28
      $region27: #{output_forward.1} parent=5 // pred_region
        // Predicated region
        $region29: #{output_forward.1} parent=27 // pred_check
          %p164 = pneg %p31
        $region30: #{output_forward.1} parent=27 // pred_check_branch
          %166 = sbr.rel (%p164) target = $region32
        $region31: #{output_forward.1} parent=27 // pred_region
          %s167 = smul.u32 2, %s11
          %p168 = scmp.lt.s32.totalorder %s167, 3
          %s169 = scalar_select %p168, %s167, 3
          %s170 = smul.addr %s169, 4
          %s171 = scalar_lea.vmem %s0, %s170
          %s172 = smul.u32 2, %s11
        $region32: #{output_forward.1} parent=27 // pred_fallthru
          _
      $region28: #{output_forward.1} parent=5 // pred_fallthru
        _
      %p173 = scmp.le.s32.totalorder 1, %s11
      %p174 = scmp.lt.s32.totalorder %s11, 3
      %p175 = pnand %p173, %p174
      %p176 = pneg %p175
      // Predicated region
      $region33: #{output_forward.1} parent=5 // pred_check
        _
      $region34: #{output_forward.1} parent=5 // pred_check_branch
        %178 = sbr.rel (%p175) target = $region36
      $region35: #{output_forward.1} parent=5 // pred_region
        %s179 = ssub.s32 %s11, 1
        // Predicated region
        $region37: #{output_forward.1} parent=35 // pred_check
          %p180 = pneg %p79
        $region38: #{output_forward.1} parent=35 // pred_check_branch
          %182 = sbr.rel (%p180) target = $region40
        $region39: #{output_forward.1} parent=35 // pred_region
          %183 = dma.done [#allocation4], 1280
        $region40: #{output_forward.1} parent=35 // pred_fallthru
          _
        %s184 = smul.u32 2, %s16
        %p185 = scmp.lt.s32.totalorder %s184, 3
        %s186 = scalar_select %p185, %s184, 3
        %s187 = smul.addr %s186, 4
        %s188 = scalar_lea.vmem %s0, %s187
        %p189 = pneg %p37
        %p190 = pneg %p34
        %p191 = pneg %p58
        %p192 = pneg %p55
        %p193 = pneg %p79
        %p194 = pneg %p76
        %p195 = pneg %p100
        %p196 = pneg %p97
        %p197 = pneg %p126
        %p198 = pneg %p123
        %s199 = sand.u32 %s113, 1
        %s200 = sand.u32 %s113, 1
        %s201 = smul.addr %s200, 32
        %s202 = scalar_lea.vmem [#allocation5], %s201
        %s203 = smul.u32 2, %s16
        %p204 = scmp.lt.s32.totalorder %s203, 3
        %s205 = scalar_select %p204, %s203, 3
        %s206 = smul.addr %s205, 4
        %s207 = scalar_lea.vmem %s0, %s206
        %s208 = smul.u32 2, %s16
        %s209 = smul.u32 2, %s16
        %210 = vst [vmem:[#allocation2 + $0x40] sm:$0xf0] 0.0
        %211 = vst [vmem:[#allocation2 + $0x48] sm:$0xf0] 0.0
        %v212 = vld [vmem:[%s1] sm:$0xff]
        %v213 = vld [vmem:[%s1 + $0x8] sm:$0xf]
        %v214 = vld [vmem:[%s3] sm:$0xff]
        %v215 = vld [vmem:[%s3 + $0x8] sm:$0xf]
        %v216 = vld [vmem:[%s207] sm:$0xff]
        %v218 = vcombine.high %v216, %v216
        %220 = vrot.lane.b32.xlu0 %v216, 17
        %v221 = vpop.permute.xlu0 %220
        %222 = vrot.lane.b32.xlu0 %v218, 17
        %v223 = vpop.permute.xlu0 %222
        %v224 = vlaneseq
        %v225 = vand.u32 %v224, 127
        %vm226 = vcmp.lt.s32.totalorder %v225, 17
        %v227 = vsel %vm226, %v221, %v223
        %v228 = vsel %vm226, %v223, %v221
        %v229 = vld [vmem:[#allocation3] sm:$0xf]
        %v230 = vld [vmem:[#allocation3 + $0x8] sm:$0xf]
        %v231 = vmul.f32 %v228, %v229
        %v232 = vmul.f32 %v227, %v230
        %233 = vst [vmem:[#allocation2] sm:$0xf] %v231
        %234 = vst [vmem:[#allocation2 + $0x8] sm:$0xf] %v232
        %235 = vrot.lane.b32.xlu0 %v216, 16
        %v236 = vpop.permute.xlu0 %235
        %237 = vrot.lane.b32.xlu0 %v218, 16
        %v238 = vpop.permute.xlu0 %237
        %vm239 = vcmp.lt.s32.totalorder %v225, 16
        %v240 = vsel %vm239, %v236, %v238
        %v241 = vsel %vm239, %v238, %v236
        %v242 = vld [vmem:[#allocation3] sm:$0xf0]
        %v243 = vld [vmem:[#allocation3 + $0x8] sm:$0xf0]
        %v246 = vrot.slane %v242, 4
        %v247 = vrot.slane %v243, 4
        %v250 = vmul.f32 %v241, %v246
        %v251 = vmul.f32 %v240, %v247
        %v254 = vrot.slane %v250, 4
        %v255 = vrot.slane %v251, 4
        %258 = vst [vmem:[#allocation2] sm:$0xf0] %v254
        %259 = vst [vmem:[#allocation2 + $0x8] sm:$0xf0] %v255
        %260 = vrot.lane.b32.xlu0 %v216, 15
        %v261 = vpop.permute.xlu0 %260
        %262 = vrot.lane.b32.xlu0 %v218, 15
        %v263 = vpop.permute.xlu0 %262
        %vm264 = vcmp.lt.s32.totalorder %v225, 15
        %v265 = vsel %vm264, %v261, %v263
        %v266 = vsel %vm264, %v263, %v261
        %v267 = vld [vmem:[#allocation3 + $0x10] sm:$0xf]
        %v268 = vld [vmem:[#allocation3 + $0x18] sm:$0xf]
        %v269 = vmul.f32 %v266, %v267
        %v270 = vmul.f32 %v265, %v268
        %271 = vst [vmem:[#allocation2 + $0x10] sm:$0xf] %v269
        %272 = vst [vmem:[#allocation2 + $0x18] sm:$0xf] %v270
        %273 = vrot.lane.b32.xlu0 %v216, 1
        %v274 = vpop.permute.xlu0 %273
        %275 = vrot.lane.b32.xlu0 %v218, 1
        %v276 = vpop.permute.xlu0 %275
        %vm277 = vcmp.lt.s32.totalorder %v225, 1
        %v278 = vsel %vm277, %v274, %v276
        %v279 = vsel %vm277, %v276, %v274
        %v280 = vld [vmem:[#allocation3 + $0x10] sm:$0xf0]
        %v281 = vld [vmem:[#allocation3 + $0x18] sm:$0xf0]
        %v284 = vrot.slane %v280, 4
        %v285 = vrot.slane %v281, 4
        %v288 = vmul.f32 %v279, %v284
        %v289 = vmul.f32 %v278, %v285
        %v292 = vrot.slane %v288, 4
        %v293 = vrot.slane %v289, 4
        %296 = vst [vmem:[#allocation2 + $0x10] sm:$0xf0] %v292
        %297 = vst [vmem:[#allocation2 + $0x18] sm:$0xf0] %v293
        %298 = vst [vmem:[#allocation2 + $0x20] sm:$0xf] %v216
        %299 = vst [vmem:[#allocation2 + $0x28] sm:$0xf] %v218
        %300 = vrot.lane.b32.xlu0 %v216, 127
        %v301 = vpop.permute.xlu0 %300
        %302 = vrot.lane.b32.xlu0 %v218, 127
        %v303 = vpop.permute.xlu0 %302
        %vm304 = vcmp.lt.s32.totalorder %v225, 127
        %v305 = vsel %vm304, %v301, %v303
        %v306 = vsel %vm304, %v303, %v301
        %v307 = vld [vmem:[#allocation3 + $0x20] sm:$0xf0]
        %v308 = vld [vmem:[#allocation3 + $0x28] sm:$0xf0]
        %v311 = vrot.slane %v307, 4
        %v312 = vrot.slane %v308, 4
        %v315 = vmul.f32 %v305, %v311
        %v316 = vmul.f32 %v306, %v312
        %v319 = vrot.slane %v315, 4
        %v320 = vrot.slane %v316, 4
        %323 = vst [vmem:[#allocation2 + $0x20] sm:$0xf0] %v319
        %324 = vst [vmem:[#allocation2 + $0x28] sm:$0xf0] %v320
        %325 = vrot.lane.b32.xlu0 %v216, 113
        %v326 = vpop.permute.xlu0 %325
        %327 = vrot.lane.b32.xlu0 %v218, 113
        %v328 = vpop.permute.xlu0 %327
        %vm329 = vcmp.lt.s32.totalorder %v225, 113
        %v330 = vsel %vm329, %v326, %v328
        %v331 = vsel %vm329, %v328, %v326
        %v332 = vld [vmem:[#allocation3 + $0x30] sm:$0xf]
        %v333 = vld [vmem:[#allocation3 + $0x38] sm:$0xf]
        %v334 = vmul.f32 %v330, %v332
        %v335 = vmul.f32 %v331, %v333
        %336 = vst [vmem:[#allocation2 + $0x30] sm:$0xf] %v334
        %337 = vst [vmem:[#allocation2 + $0x38] sm:$0xf] %v335
        %338 = vrot.lane.b32.xlu0 %v216, 112
        %v339 = vpop.permute.xlu0 %338
        %340 = vrot.lane.b32.xlu0 %v218, 112
        %v341 = vpop.permute.xlu0 %340
        %vm342 = vcmp.lt.s32.totalorder %v225, 112
        %v343 = vsel %vm342, %v339, %v341
        %v344 = vsel %vm342, %v341, %v339
        %v345 = vld [vmem:[#allocation3 + $0x30] sm:$0xf0]
        %v346 = vld [vmem:[#allocation3 + $0x38] sm:$0xf0]
        %v349 = vrot.slane %v345, 4
        %v350 = vrot.slane %v346, 4
        %v353 = vmul.f32 %v343, %v349
        %v354 = vmul.f32 %v344, %v350
        %v357 = vrot.slane %v353, 4
        %v358 = vrot.slane %v354, 4
        %361 = vst [vmem:[#allocation2 + $0x30] sm:$0xf0] %v357
        %362 = vst [vmem:[#allocation2 + $0x38] sm:$0xf0] %v358
        %363 = vrot.lane.b32.xlu0 %v216, 111
        %v364 = vpop.permute.xlu0 %363
        %365 = vrot.lane.b32.xlu0 %v218, 111
        %v366 = vpop.permute.xlu0 %365
        %vm367 = vcmp.lt.s32.totalorder %v225, 111
        %v368 = vsel %vm367, %v364, %v366
        %v369 = vsel %vm367, %v366, %v364
        %v370 = vld [vmem:[#allocation3 + $0x40] sm:$0xf]
        %v371 = vld [vmem:[#allocation3 + $0x48] sm:$0xf]
        %v372 = vmul.f32 %v368, %v370
        %v373 = vmul.f32 %v369, %v371
        %374 = vst [vmem:[#allocation2 + $0x40] sm:$0xf] %v372
        %375 = vst [vmem:[#allocation2 + $0x48] sm:$0xf] %v373
        %v376 = vld [vmem:[#allocation2] sm:$0xff]
        %v377 = vld [vmem:[#allocation2 + $0x8] sm:$0xff]
        %v378 = vld [vmem:[#allocation2 + $0x10] sm:$0xff]
        %v379 = vld [vmem:[#allocation2 + $0x18] sm:$0xff]
        %v380 = vld [vmem:[#allocation2 + $0x20] sm:$0xff]
        %v381 = vld [vmem:[#allocation2 + $0x28] sm:$0xff]
        %v382 = vld [vmem:[#allocation2 + $0x30] sm:$0xff]
        %v383 = vld [vmem:[#allocation2 + $0x38] sm:$0xff]
        %v384 = vld [vmem:[#allocation2 + $0x40] sm:$0xff]
        %v385 = vld [vmem:[#allocation2 + $0x48] sm:$0xff]
        %387 = vset.pattern.permute.xlu0 0
        %388 = vperm.xlu0 %387, %v214
        %v389 = vpop.permute.xlu0 %388
        %392 = vset.pattern.permute.xlu0 0
        %393 = vperm.xlu0 %392, %v215
        %v394 = vpop.permute.xlu0 %393
        %vm396 = vcmask 326656
        %v398 = vsel %vm396, %v212, 0
        %v401 = vsel %vm396, %v213, 0
        %403 = vmatprep.subr.mxu0 0.0
        %404 = vmatpush1.msra.mxu0 0.0
        %405 = vmatprep.subr.mxu0 0.0
        %406 = vmatpush1.msra.mxu0 0.0
        %407 = vmatprep.subr.mxu0 0.0
        %408 = vmatpush1.msra.mxu0 0.0
        %409 = vmatprep.subr.mxu0 0.0
        %410 = vmatpush1.msra.mxu0 0.0
        %411 = vmatprep.subr.mxu0 0.0
        %412 = vmatpush1.msra.mxu0 0.0
        %413 = vmatprep.subr.mxu0 0.0
        %414 = vmatpush1.msra.mxu0 0.0
        %415 = vmatprep.subr.mxu0 0.0
        %416 = vmatpush1.msra.mxu0 0.0
        %417 = vmatprep.subr.mxu0 0.0
        %418 = vmatpush1.msra.mxu0 0.0
        %419 = vmatprep.subr.mxu0 0.0
        %420 = vmatpush1.msra.mxu0 0.0
        %421 = vmatprep.subr.mxu0 0.0
        %422 = vmatpush1.msra.mxu0 0.0
        %423 = vmatprep.subr.mxu0 0.0
        %424 = vmatpush1.msra.mxu0 0.0
        %425 = vmatprep.subr.mxu0 %v385
        %426 = vmatpush1.msra.mxu0 %v384
        %427 = vmatprep.subr.mxu0 %v383
        %428 = vmatpush1.msra.mxu0 %v382
        %429 = vmatprep.subr.mxu0 %v381
        %430 = vmatpush1.msra.mxu0 %v380
        %431 = vmatprep.subr.mxu0 %v379
        %432 = vmatpush1.msra.mxu0 %v378
        %433 = vmatprep.subr.mxu0 %v377
        %434 = vmatpush1.msra.mxu0 %v376
        %435 = vmatprep.subr.mxu0 0.0
        %436 = vmatpush2.msra.mxu0 0.0
        %437 = vmatprep.subr.mxu0 0.0
        %438 = vmatpush2.msra.mxu0 0.0
        %439 = vmatprep.subr.mxu0 0.0
        %440 = vmatpush2.msra.mxu0 0.0
        %441 = vmatprep.subr.mxu0 0.0
        %442 = vmatpush2.msra.mxu0 0.0
        %443 = vmatprep.subr.mxu0 0.0
        %444 = vmatpush2.msra.mxu0 0.0
        %445 = vmatprep.subr.mxu0 0.0
        %446 = vmatpush2.msra.mxu0 0.0
        %447 = vmatprep.subr.mxu0 0.0
        %448 = vmatpush2.msra.mxu0 0.0
        %449 = vmatprep.subr.mxu0 0.0
        %450 = vmatpush2.msra.mxu0 0.0
        %451 = vmatprep.subr.mxu0 0.0
        %452 = vmatpush2.msra.mxu0 0.0
        %453 = vmatprep.subr.mxu0 0.0
        %454 = vmatpush2.msra.mxu0 0.0
        %455 = vmatprep.subr.mxu0 0.0
        %456 = vmatpush2.msra.mxu0 0.0
        %457 = vmatprep.subr.mxu0 0.0
        %458 = vmatpush2.msra.mxu0 0.0
        %459 = vmatprep.subr.mxu0 0.0
        %460 = vmatpush2.msra.mxu0 0.0
        %461 = vmatprep.subr.mxu0 0.0
        %462 = vmatpush2.msra.mxu0 0.0
        %463 = vmatprep.subr.mxu0 0.0
        %464 = vmatpush2.msra.mxu0 0.0
        %465 = vmatprep.subr.mxu0 0.0
        %466 = vmatpush2.msra.mxu0 0.0
        %467 = vmatprep.mubr.f32.mxu0 0.0
        %468 = vmatmul.mubr.f32.gmra.mxu0 %v398
        %v469 = vpop.f32.mrf.mxu0
        %v470 = vadd.f32 %v389, %v469
        %v471 = vpop.f32.mrf.mxu0
        %v472 = vadd.f32 %v389, %v471
        %473 = vmatprep.mubr.f32.mxu0 0.0
        %474 = vmatmul.mubr.f32.gmra.mxu0 %v401
        %v475 = vpop.f32.mrf.mxu0
        %v476 = vadd.f32 %v394, %v475
        %v477 = vpop.f32.mrf.mxu0
        %v478 = vadd.f32 %v394, %v477
        %479 = vdwg.mxu0
        %v480 = vtanh.pop %v470
        %v481 = vtanh.pop %v472
        %v482 = vtanh.pop %v476
        %v483 = vtanh.pop %v478
        %484 = vst [vmem:[%s202] sm:$0xff] %v480
        %485 = vst [vmem:[%s202 + $0x8] sm:$0xff] %v481
        %486 = vst [vmem:[%s202 + $0x10] sm:$0xf] %v482
        %487 = vst [vmem:[%s202 + $0x18] sm:$0xf] %v483
        %s488 = sand.u32 %s113, 1
        %s489 = sand.u32 %s113, 1
        %s490 = smul.addr %s489, 32
        %s491 = scalar_lea.vmem [#allocation5], %s490
        // Predicated region
        $region41: #{output_forward.1} parent=35 // pred_check
          %p492 = pneg %p123
        $region42: #{output_forward.1} parent=35 // pred_check_branch
          %494 = sbr.rel (%p492) target = $region44
        $region43: #{output_forward.1} parent=35 // pred_region
          %s495 = smul.u32 2, %s16
          %s496 = smul.addr %s495, 8
          %s497 = scalar_lea.vmem %s4, %s496
          // Predicated region
          $region45: #{output_forward.1} parent=43 // pred_check
            _
          $region46: #{output_forward.1} parent=43 // pred_check_branch
            %499 = sbr.rel (0) target = $region48
          $region47: #{output_forward.1} parent=43 // pred_region
            // Predicated region
            $region49: #{output_forward.1} parent=47 // pred_check
              _
            $region50: #{output_forward.1} parent=47 // pred_check_branch
              %501 = sbr.rel (0) target = $region52
            $region51: #{output_forward.1} parent=47 // pred_region
              loop: start=0, step=1, limit=1
              $region53: #{output_forward.1} parent=51 // loop_pre_header
                _
              $region54: #{output_forward.1} parent=51 // loop_header
                %s503 = sphi 0, %s507
                %p504 = scmp.ge.s32.totalorder %s503, 1
                %s508 = sphi %s491, %s491
                %s509 = sphi %s497, %s497
              $region55: #{output_forward.1} parent=51 // loop_header_branch
                %506 = sbr.rel (%p504) target = $region59
              $region56: #{output_forward.1} parent=51 // loop_body
                %v510 = vld [vmem:[%s508] sm:$0xff]
                %511 = vst [vmem:[%s509] sm:$0xff] %v510
                %v512 = vld [vmem:[%s508 + $0x8] sm:$0xff]
                %513 = vst [vmem:[%s509 + $0x8] sm:$0xff] %v512
                %v514 = vld [vmem:[%s508 + $0x10] sm:$0xff]
                %515 = vst [vmem:[%s509 + $0x20] sm:$0xff] %v514
                %v516 = vld [vmem:[%s508 + $0x18] sm:$0xff]
                %517 = vst [vmem:[%s509 + $0x28] sm:$0xff] %v516
              $region57: #{output_forward.1} parent=51 // loop_footer
                %s507 = sadd.s32 1, %s503
              $region58: #{output_forward.1} parent=51 // loop_footer_branch
                %502 = sbr.rel target = $region54
              $region59: #{output_forward.1} parent=51 // loop_exit
                _
            $region52: #{output_forward.1} parent=47 // pred_fallthru
              _
            // Predicated region
            $region60: #{output_forward.1} parent=47 // pred_check
              _
            $region61: #{output_forward.1} parent=47 // pred_check_branch
              %519 = sbr.rel target = $region63
            $region62: #{output_forward.1} parent=47 // pred_region
              _
            $region63: #{output_forward.1} parent=47 // pred_fallthru
              _
          $region48: #{output_forward.1} parent=43 // pred_fallthru
            _
          %520 = vnop
        $region44: #{output_forward.1} parent=35 // pred_fallthru
          _
      $region36: #{output_forward.1} parent=5 // pred_fallthru
        _
      %p521 = scmp.le.s32.totalorder 2, %s11
      // Predicated region
      $region64: #{output_forward.1} parent=5 // pred_check
        %p522 = pneg %p521
      $region65: #{output_forward.1} parent=5 // pred_check_branch
        %524 = sbr.rel (%p522) target = $region67
      $region66: #{output_forward.1} parent=5 // pred_region
        %s525 = ssub.s32 %s11, 2
        // Predicated region
        $region68: #{output_forward.1} parent=66 // pred_check
          %p526 = pneg %p129
        $region69: #{output_forward.1} parent=66 // pred_check_branch
          %528 = sbr.rel (%p526) target = $region71
        $region70: #{output_forward.1} parent=66 // pred_region
          %s529 = sand.u32 %s114, 1
          %s530 = sand.u32 %s114, 1
          %s531 = smul.addr %s530, 32
          %s532 = scalar_lea.vmem [#allocation5], %s531
        $region71: #{output_forward.1} parent=66 // pred_fallthru
          _
      $region67: #{output_forward.1} parent=5 // pred_fallthru
        _
    $region6: #{output_forward.1} parent=1 // loop_footer
      %s15 = sadd.s32 1, %s11
    $region7: #{output_forward.1} parent=1 // loop_footer_branch
      %10 = sbr.rel target = $region3
    $region8: #{output_forward.1} parent=1 // loop_exit
      _
    %533 = vsyncpa [#allocation4], 1
    %s534 = scalar_lea.sflag [#allocation4], 1
    %535 = vsyncpa %s534, 1

</llo_original>
